<compile_context>
chip_gen: v7x
topology: tpu7x:2x2x1
jax: 0.10.0
libtpu: 0.0.40
codegen_flags: <defaults>
</compile_context>

<pallas_src>
import functools

import jax
import jax.numpy as jnp
from jax.experimental import pallas as pl
from jax.experimental.pallas import tpu as pltpu

_LANE = 128
_INV_SQRT2 = 0.7071067811865476


def _round_up(x, m):
    return ((x + m - 1) // m) * m


def _gelu(h, approx):
    if approx:
        # tanh-approx GELU -> transcendental lands on the EUP slot (v6e/v7x);
        # ~1e-3 relative difference vs torch.nn.GELU() exact erf.
        return jax.nn.gelu(h, approximate=True)
    return 0.5 * h * (1.0 + jax.lax.erf(h * jnp.float32(_INV_SQRT2)))


# --------------------------------------------------------------------------
# Kernels
# --------------------------------------------------------------------------
def _mlp_kernel_single(x_ref, w1_ref, b1_ref, w2_ref, b2_ref, o_ref, *, approx):
    # Weight-resident path: all weight/bias block indices are constant across
    # the grid, so they are fetched once and stay in VMEM.  No accumulator.
    h = jnp.dot(x_ref[...], w1_ref[...], preferred_element_type=jnp.float32)
    h = h + b1_ref[...]
    h = _gelu(h, approx)
    # TODO(synk): dropout (p=0.1) is identity in eval mode; training-mode
    # stochastic dropout would use pltpu.prng_seed / pltpu.prng_random_bits.
    y = jnp.dot(h.astype(w2_ref.dtype), w2_ref[...],
                preferred_element_type=jnp.float32)
    o_ref[...] = (y + b2_ref[...]).astype(o_ref.dtype)


def _mlp_kernel_multi(x_ref, w1_ref, b1_ref, w2_ref, b2_ref, o_ref, acc_ref,
                      *, approx):
    # Streaming path: hidden dim split across grid axis 1 ("arbitrary", last).
    # fc2 partials accumulate into an f32 VMEM scratch; b2 is folded into the
    # k==0 init so the final writeback is a pure cast.
    k = pl.program_id(1)
    th = w1_ref.shape[1]

    @pl.when(k == 0)
    def _():
        acc_ref[...] = jnp.zeros_like(acc_ref) + b2_ref[...]

    h = jnp.dot(x_ref[...], w1_ref[...], preferred_element_type=jnp.float32)
    off = pl.multiple_of(k * th, _LANE)
    h = h + b1_ref[:, pl.ds(off, th)]        # b1 is resident; slice per step
    h = _gelu(h, approx)
    acc_ref[...] += jnp.dot(h.astype(w2_ref.dtype), w2_ref[...],
                            preferred_element_type=jnp.float32)

    @pl.when(k == pl.num_programs(1) - 1)
    def _():
        o_ref[...] = acc_ref[...].astype(o_ref.dtype)


# --------------------------------------------------------------------------
# Tile sizing / VMEM budgeting
# --------------------------------------------------------------------------
def _vmem_bytes(tm, th, Hp, C_in, C_out_p, in_item, w_item, out_item, single):
    """Conservative VMEM footprint (double-buffered blocks + scratch + temps)."""
    use = 2 * tm * C_in * in_item           # x block
    use += 2 * C_in * th * w_item           # w1 block
    use += 2 * th * C_out_p * w_item        # w2 block
    use += 2 * Hp * 4 + 2 * C_out_p * 4     # biases (f32)
    use += 2 * tm * C_out_p * out_item      # out block
    if not single:
        use += tm * C_out_p * 4             # f32 accumulator scratch
    use += 3 * tm * th * 4                  # f32 GELU temporaries (conservative)
    return use


def _autosize(M, C_in, H, C_out_p, in_item, w_item, out_item, budget, small_vmem):
    sublane = max(8, 32 // in_item)
    if in_item <= 2:
        base_tm = 512 if small_vmem else 1024
    else:
        base_tm = 256 if small_vmem else 512
    tm = _round_up(min(base_tm, _round_up(M, sublane)), sublane)
    # >= 2 row tiles so v7x's two TensorCores both get work (harmless on 1-TC).
    if pl.cdiv(M, tm) == 1 and M > sublane:
        tm = _round_up(pl.cdiv(M, 2), sublane)

    # 1) weight-resident single-step path
    t = tm
    while t >= sublane:
        if _vmem_bytes(t, H, H, C_in, C_out_p, in_item, w_item, out_item,
                       True) <= budget:
            return t, H, H, True
        if t == sublane:
            break
        t = max(sublane, _round_up(t // 2, sublane))

    # 2) streaming path with a hidden reduction axis
    th = 512
    while True:
        Hp = _round_up(H, th)
        t = tm
        while t >= sublane:
            if _vmem_bytes(t, th, Hp, C_in, C_out_p, in_item, w_item, out_item,
                           False) <= budget:
                return t, th, Hp, False
            if t == sublane:
                break
            t = max(sublane, _round_up(t // 2, sublane))
        if th == _LANE:
            break
        th //= 2
    return sublane, _LANE, _round_up(H, _LANE), False


# --------------------------------------------------------------------------
# Wrapper
# --------------------------------------------------------------------------
def mlp_forward(x, w1, b1, w2, b2, *, tm=None, th=None, approximate_gelu=False):
    """Fused MLP forward: y = fc2(GELU(fc1(x))) (dropout = identity, eval mode).

    x:  (B, N, C_in)
    w1: (C_in, H)      b1: (H,) or (1, H)
    w2: (H, C_out)     b2: (C_out,) or (1, C_out)
    Weights are already pre-transposed from PyTorch's (out, in) layout.
    """
    B, N, C_in = x.shape
    H = w1.shape[1]
    C_out = w2.shape[1]
    M = B * N
    x2 = x.reshape(M, C_in)

    in_item = jnp.dtype(x.dtype).itemsize
    w_item = jnp.dtype(w1.dtype).itemsize
    sublane = max(8, 32 // in_item)

    # Lane-dense output columns (unmasked vst); padded cols sliced off later.
    C_out_p = _round_up(C_out, _LANE)

    # --- per-generation VMEM budget --------------------------------------
    try:
        info = pltpu.get_tpu_info()
        vmem_cap = int(getattr(info, "vmem_capacity_bytes", 128 << 20))
    except Exception:  # not on TPU / info unavailable
        vmem_cap = 128 << 20
    small_vmem = vmem_cap <= (64 << 20)                 # v7x-class parts
    budget = (48 << 20) if small_vmem else (100 << 20)

    # --- tile selection ----------------------------------------------------
    if tm is None and th is None:
        tm, th, Hp, single = _autosize(M, C_in, H, C_out_p, in_item, w_item,
                                       in_item, budget, small_vmem)
    else:
        if tm is None:
            tm = 256 if small_vmem else 512
        tm = _round_up(min(tm, _round_up(M, sublane)), sublane)
        if pl.cdiv(M, tm) == 1 and M > sublane:
            tm = _round_up(pl.cdiv(M, 2), sublane)
        if th is None or th >= H:
            th, Hp, single = H, H, True
        else:
            th = max(_LANE, (th // _LANE) * _LANE)
            Hp, single = _round_up(H, th), False

    # --- padding (zeros are exact no-ops through fc1 / GELU / fc2) ---------
    b1 = jnp.reshape(b1, (1, H)).astype(jnp.float32)
    b2 = jnp.reshape(b2, (1, C_out)).astype(jnp.float32)
    if Hp != H:
        w1 = jnp.pad(w1, ((0, 0), (0, Hp - H)))
        b1 = jnp.pad(b1, ((0, 0), (0, Hp - H)))
        w2 = jnp.pad(w2, ((0, Hp - H), (0, 0)))
    if C_out_p != C_out:
        w2 = jnp.pad(w2, ((0, 0), (0, C_out_p - C_out)))
        b2 = jnp.pad(b2, ((0, 0), (0, C_out_p - C_out)))

    # --- compiler params / cost -------------------------------------------
    usage = _vmem_bytes(tm, th, Hp, C_in, C_out_p, in_item, w_item, in_item,
                        single)
    ceiling = (56 << 20) if small_vmem else (100 << 20)
    vmem_limit = int(min(ceiling, max(usage + (4 << 20), 32 << 20)))

    n_row_tiles = pl.cdiv(M, tm)
    weight_passes = 1 if single else n_row_tiles
    cost = pl.CostEstimate(
        flops=2 * M * (C_in * Hp + Hp * C_out_p),
        transcendentals=M * Hp,
        bytes_accessed=int(M * C_in * in_item
                           + weight_passes * (C_in * Hp + Hp * C_out_p) * w_item
                           + Hp * 4 + C_out_p * 4
                           + M * C_out_p * in_item),
    )

    if single:
        kernel = functools.partial(_mlp_kernel_single, approx=approximate_gelu)
        grid_spec = pltpu.PrefetchScalarGridSpec(
            num_scalar_prefetch=0,
            grid=(n_row_tiles,),
            in_specs=[
                pl.BlockSpec((tm, C_in), lambda i: (i, 0)),
                pl.BlockSpec((C_in, Hp), lambda i: (0, 0)),      # resident
                pl.BlockSpec((1, Hp), lambda i: (0, 0)),         # resident
                pl.BlockSpec((Hp, C_out_p), lambda i: (0, 0)),   # resident
                pl.BlockSpec((1, C_out_p), lambda i: (0, 0)),    # resident
            ],
            out_specs=pl.BlockSpec((tm, C_out_p), lambda i: (i, 0)),
            scratch_shapes=(),
        )
        dim_sem = ("parallel",)
    else:
        kernel = functools.partial(_mlp_kernel_multi, approx=approximate_gelu)
        grid_spec = pltpu.PrefetchScalarGridSpec(
            num_scalar_prefetch=0,
            grid=(n_row_tiles, Hp // th),
            in_specs=[
                pl.BlockSpec((tm, C_in), lambda i, k: (i, 0)),
                pl.BlockSpec((C_in, th), lambda i, k: (0, k)),
                pl.BlockSpec((1, Hp), lambda i, k: (0, 0)),      # b1 resident
                pl.BlockSpec((th, C_out_p), lambda i, k: (k, 0)),
                pl.BlockSpec((1, C_out_p), lambda i, k: (0, 0)),
            ],
            out_specs=pl.BlockSpec((tm, C_out_p), lambda i, k: (i, 0)),
            scratch_shapes=[pltpu.VMEM((tm, C_out_p), jnp.float32)],
        )
        dim_sem = ("parallel", "arbitrary")

    out2 = pl.pallas_call(
        kernel,
        out_shape=jax.ShapeDtypeStruct((M, C_out_p), x.dtype),
        grid_spec=grid_spec,
        compiler_params=pltpu.CompilerParams(
            dimension_semantics=dim_sem,
            vmem_limit_bytes=vmem_limit),
        cost_estimate=cost,
    )(x2, w1, b1, w2, b2)

    if C_out_p != C_out:
        out2 = out2[:, :C_out]
    return out2.reshape(B, N, C_out)


def init_mlp_params(key, in_features, hidden_features=None, out_features=None,
                    dtype=jnp.float32):
    """Deterministic synthetic init (shapes match nn.Linear in the module)."""
    out_features = out_features or in_features
    hidden_features = hidden_features or in_features
    k1, k2, k3, k4 = jax.random.split(key, 4)
    # PyTorch nn.Linear stores weight as (out, in); pre-transpose to (in, out)
    # so the kernel does plain x @ W.
    w1 = jax.random.normal(k1, (in_features, hidden_features), dtype) * 0.02
    b1 = jax.random.normal(k2, (1, hidden_features), dtype) * 0.02
    w2 = jax.random.normal(k3, (hidden_features, out_features), dtype) * 0.02
    b2 = jax.random.normal(k4, (1, out_features), dtype) * 0.02
    return w1, b1, w2, b2


if __name__ == "__main__":
    key = jax.random.PRNGKey(0)
    kx, kp = jax.random.split(key)

    B, N, C = 2, 8, 32      # batch, seq, in_features
    H = 256                 # hidden_features

    x = jax.random.normal(kx, (B, N, C), jnp.float32)
    w1, b1, w2, b2 = init_mlp_params(kp, in_features=C, hidden_features=H)

    # reference in plain JAX (eval-mode dropout == identity, exact erf GELU)
    h_ref = x.reshape(-1, C) @ w1 + b1
    h_ref = 0.5 * h_ref * (1.0 + jax.lax.erf(h_ref / jnp.sqrt(2.0)))
    y_ref = (h_ref @ w2 + b2).reshape(B, N, -1)

    # Path 1: auto-sized weight-resident single-step path (production default).
    out1 = mlp_forward(x, w1, b1, w2, b2)
    # Path 2: forced hidden-dim streaming path (exercises the reduction axis,
    # the f32 accumulator, b2 init-folding and resident-b1 slicing).
    out2 = mlp_forward(x, w1, b1, w2, b2, tm=8, th=128)
    jax.block_until_ready((out1, out2))

    assert jnp.allclose(out1, y_ref, atol=1e-4, rtol=1e-4), (
        float(jnp.max(jnp.abs(out1 - y_ref))))
    assert jnp.allclose(out2, y_ref, atol=1e-4, rtol=1e-4), (
        float(jnp.max(jnp.abs(out2 - y_ref))))

    print("KERNEL_OK")
</pallas_src>

<mosaic_0001>
module attributes {stable_mosaic.version = 11 : i64} {
  func.func @_mlp_kernel_single(%arg0: i32, %arg1: memref<8x32xf32, #tpu.memory_space<vmem>>, %arg2: memref<32x256xf32, #tpu.memory_space<vmem>>, %arg3: memref<1x256xf32, #tpu.memory_space<vmem>>, %arg4: memref<256x128xf32, #tpu.memory_space<vmem>>, %arg5: memref<1x128xf32, #tpu.memory_space<vmem>>, %arg6: memref<8x128xf32, #tpu.memory_space<vmem>>) attributes {dimension_semantics = [#tpu.dimension_semantics<parallel>], iteration_bounds = array<i64: 2>, scalar_prefetch = 0 : i64, scratch_operands = 0 : i64, tpu.core_type = #tpu.core_type<tc>, window_params = [{transform_indices = @transform_0, window_bounds = array<i64: 8, 32>}, {pipeline_mode = #tpu.pipeline_mode<synchronous>, transform_indices = @transform_1, window_bounds = array<i64: 32, 256>}, {pipeline_mode = #tpu.pipeline_mode<synchronous>, transform_indices = @transform_2, window_bounds = array<i64: 1, 256>}, {pipeline_mode = #tpu.pipeline_mode<synchronous>, transform_indices = @transform_3, window_bounds = array<i64: 256, 128>}, {pipeline_mode = #tpu.pipeline_mode<synchronous>, transform_indices = @transform_4, window_bounds = array<i64: 1, 128>}, {transform_indices = @transform_5, window_bounds = array<i64: 8, 128>}]} {
    %c0 = arith.constant 0 : index
    %c0_0 = arith.constant 0 : index
    %0 = vector.load %arg1[%c0, %c0_0] : memref<8x32xf32, #tpu.memory_space<vmem>>, vector<8x32xf32>
    %c0_1 = arith.constant 0 : index
    %c0_2 = arith.constant 0 : index
    %1 = vector.load %arg2[%c0_1, %c0_2] : memref<32x256xf32, #tpu.memory_space<vmem>>, vector<32x256xf32>
    %cst = arith.constant dense<0.000000e+00> : vector<8x256xf32>
    %2 = tpu.matmul %0, %1, %cst {dimension_numbers = #tpu.dot_dimension_numbers<[1], [0], [0], [1], [0, 0, 1, 1], [], []>} : vector<8x32xf32>, vector<32x256xf32>, vector<8x256xf32> -> vector<8x256xf32>
    %c0_3 = arith.constant 0 : index
    %c0_4 = arith.constant 0 : index
    %3 = vector.load %arg3[%c0_3, %c0_4] : memref<1x256xf32, #tpu.memory_space<vmem>>, vector<1x256xf32>
    %4 = vector.broadcast %3 : vector<1x256xf32> to vector<8x256xf32>
    %5 = arith.addf %2, %4 : vector<8x256xf32>
    %cst_5 = arith.constant 5.000000e-01 : f32
    %6 = vector.broadcast %cst_5 : f32 to vector<8x256xf32>
    %7 = arith.mulf %6, %5 : vector<8x256xf32>
    %cst_6 = arith.constant 0.707106769 : f32
    %8 = vector.broadcast %cst_6 : f32 to vector<8x256xf32>
    %9 = arith.mulf %5, %8 : vector<8x256xf32>
    %10 = math.erf %9 : vector<8x256xf32>
    %cst_7 = arith.constant 1.000000e+00 : f32
    %11 = vector.broadcast %cst_7 : f32 to vector<8x256xf32>
    %12 = arith.addf %11, %10 : vector<8x256xf32>
    %13 = arith.mulf %7, %12 : vector<8x256xf32>
    %c0_8 = arith.constant 0 : index
    %c0_9 = arith.constant 0 : index
    %14 = vector.load %arg4[%c0_8, %c0_9] : memref<256x128xf32, #tpu.memory_space<vmem>>, vector<256x128xf32>
    %cst_10 = arith.constant dense<0.000000e+00> : vector<8x128xf32>
    %15 = tpu.matmul %13, %14, %cst_10 {dimension_numbers = #tpu.dot_dimension_numbers<[1], [0], [0], [1], [0, 0, 1, 1], [], []>} : vector<8x256xf32>, vector<256x128xf32>, vector<8x128xf32> -> vector<8x128xf32>
    %c0_11 = arith.constant 0 : index
    %c0_12 = arith.constant 0 : index
    %16 = vector.load %arg5[%c0_11, %c0_12] : memref<1x128xf32, #tpu.memory_space<vmem>>, vector<1x128xf32>
    %17 = vector.broadcast %16 : vector<1x128xf32> to vector<8x128xf32>
    %18 = arith.addf %15, %17 : vector<8x128xf32>
    %c0_13 = arith.constant 0 : index
    %c0_14 = arith.constant 0 : index
    %19 = vector.load %arg6[%c0_13, %c0_14] : memref<8x128xf32, #tpu.memory_space<vmem>>, vector<8x128xf32>
    tpu.vector_store %arg6[%c0_13, %c0_14], %18 {strides = array<i32>} : memref<8x128xf32, #tpu.memory_space<vmem>>, vector<8x128xf32>,
    return
  }
  func.func @transform_0(%arg0: i32) -> (i32, i32) {
    %c0_i32 = arith.constant 0 : i32
    %c0_i32_0 = arith.constant 0 : i32
    return %arg0, %c0_i32 : i32, i32
  }
  func.func @transform_1(%arg0: i32) -> (i32, i32) {
    %c0_i32 = arith.constant 0 : i32
    %c0_i32_0 = arith.constant 0 : i32
    %c0_i32_1 = arith.constant 0 : i32
    return %c0_i32, %c0_i32_0 : i32, i32
  }
  func.func @transform_2(%arg0: i32) -> (i32, i32) {
    %c0_i32 = arith.constant 0 : i32
    %c0_i32_0 = arith.constant 0 : i32
    %c0_i32_1 = arith.constant 0 : i32
    return %c0_i32, %c0_i32_0 : i32, i32
  }
  func.func @transform_3(%arg0: i32) -> (i32, i32) {
    %c0_i32 = arith.constant 0 : i32
    %c0_i32_0 = arith.constant 0 : i32
    %c0_i32_1 = arith.constant 0 : i32
    return %c0_i32, %c0_i32_0 : i32, i32
  }
  func.func @transform_4(%arg0: i32) -> (i32, i32) {
    %c0_i32 = arith.constant 0 : i32
    %c0_i32_0 = arith.constant 0 : i32
    %c0_i32_1 = arith.constant 0 : i32
    return %c0_i32, %c0_i32_0 : i32, i32
  }
  func.func @transform_5(%arg0: i32) -> (i32, i32) {
    %c0_i32 = arith.constant 0 : i32
    %c0_i32_0 = arith.constant 0 : i32
    return %arg0, %c0_i32 : i32, i32
  }
}

</mosaic_0001>

<llo_original>
// kernel: tpu_custom_call.1
$region0: #{tpu_custom_call.1}
  #allocation0 [shape = 'u32[]', space=smem, size = 0x4, offset = 0x4, fixed_abs, tag = 'smem constant byte address 0x4 - core index']
  #allocation1 [shape = 'u32[144,128]{1,0:T(1,128)}', space=vmem, size = 0x12000, scoped, tag = 'internal scratch']
  %s0 = inlined_call_operand.hbm [shape: f32[16,32], index: 0, kind: input, shape index: {}]
  %s1 = inlined_call_operand.hbm [shape: f32[32,256], index: 1, kind: input, shape index: {}]
  %s2 = inlined_call_operand.vmem [shape: f32[1,256], index: 2, kind: input, shape index: {}]
  %s3 = inlined_call_operand.hbm [shape: f32[256,128], index: 3, kind: input, shape index: {}]
  %s4 = inlined_call_operand.vmem [shape: f32[1,128], index: 4, kind: input, shape index: {}]
  %s5 = inlined_call_operand.hbm [shape: f32[16,128], index: 5, kind: output, shape index: {}]
  %s6 = sld [smem:[#allocation0]]
  $region65: #{tpu_custom_call.1} parent=0
    _
  %s8 = ssub.s32 1, %s6
  %s9 = scalar_select 0, %s8, %s6
  $region1: #{tpu_custom_call.1} parent=0
    #allocation2 [shape = 'u8[8192]{0}', space=vmem, size = 0x2000, scoped, tag = 'input window, operand 0']
    #allocation3 [shape = 's32[2]{0}', space=sflag, size = 0x8, scoped, tag = 'scoped memory for tpu_custom_call.1']
    #allocation4 [shape = 's32[2]{0}', space=sflag, size = 0x8, scoped, tag = 'scoped memory for tpu_custom_call.1']
    #allocation5 [shape = 'u8[32768]{0}', space=vmem, size = 0x8000, scoped, tag = 'input window, operand 1, single buffered']
    #allocation6 [shape = 's32[1]{0}', space=sflag, size = 0x4, scoped, tag = 'scoped memory for tpu_custom_call.1']
    #allocation7 [shape = 'u8[131072]{0}', space=vmem, size = 0x20000, scoped, tag = 'input window, operand 3, single buffered']
    #allocation8 [shape = 'u8[8192]{0}', space=vmem, size = 0x2000, scoped, tag = 'output window, operand 0']
    %10 = vsyncpa [#allocation3], 0
    %s11 = scalar_lea.sflag [#allocation3], 1
    %12 = vsyncpa %s11, 0
    %13 = vsyncpa [#allocation6], 0
    %14 = vsyncpa [#allocation4], 0
    %s15 = scalar_lea.sflag [#allocation4], 1
    %16 = vsyncpa %s15, 0
    loop: start=0, step=1, limit=4
    $region2: #{tpu_custom_call.1} parent=1 // loop_pre_header
      _
    $region3: #{tpu_custom_call.1} parent=1 // loop_header
      %s18 = sphi 0, %s22
      %p19 = scmp.ge.s32.totalorder %s18, 4
      %s28 = sphi 0, %s30
      %s31 = sphi 0, %s28
      %s32 = sphi 0, %s31
      %s48 = sphi 0, %s32
      %s52 = sphi 0, %s52
      %s54 = sphi 0, %s52
      %s55 = sphi 0, %s54
      %s69 = sphi 0, %s55
      %s73 = sphi 0, %s73
      %s75 = sphi 0, %s73
      %s76 = sphi 0, %s75
      %s90 = sphi 0, %s76
      %s94 = sphi 0, %s94
      %s96 = sphi 0, %s94
      %s97 = sphi 0, %s96
      %s111 = sphi 0, %s97
      %s115 = sphi 0, %s115
      %s117 = sphi 0, %s115
      %s118 = sphi 0, %s117
      %s132 = sphi 0, %s118
      %s138 = sphi 0, %s140
      %s141 = sphi 0, %s138
      %s142 = sphi 0, %s141
      %s158 = sphi 0, %s142
    $region4: #{tpu_custom_call.1} parent=1 // loop_header_branch
      %21 = sbr.rel (%p19) target = $region8
    $region5: #{tpu_custom_call.1} parent=1 // loop_body
      %s23 = ssub.s32 %s18, 1
      %s24 = ssub.s32 %s18, 2
      %s25 = sadd.s32 %s18, 1
      %s26 = ssub.s32 %s18, %s25
      %p27 = scmp.eq.s32.totalorder %s26, 0
      %s29 = sadd.s32 %s28, 1
      %s30 = scalar_select %p27, %s28, %s29
      %p33 = pneg %p27
      %p34 = scmp.eq.s32.totalorder %s18, 1
      %p35 = por %p33, %p34
      %p36 = scmp.ne.s32.totalorder %s28, %s31
      %p37 = scmp.eq.s32.totalorder %s18, 0
      %p38 = por %p36, %p37
      %p39 = scmp.ne.s32.totalorder %s28, %s31
      %p40 = scmp.eq.s32.totalorder %s23, 1
      %p41 = por %p39, %p40
      %p42 = scmp.ne.s32.totalorder %s31, %s32
      %p43 = scmp.eq.s32.totalorder %s23, 0
      %p44 = por %p42, %p43
      %p45 = scmp.ne.s32.totalorder %s31, %s32
      %p46 = scmp.eq.s32.totalorder %s24, 1
      %p47 = por %p45, %p46
      %p49 = scmp.ne.s32.totalorder %s32, %s48
      %p50 = scmp.eq.s32.totalorder %s24, 0
      %p51 = por %p49, %p50
      %s53 = sadd.s32 %s52, 1
      %p56 = scmp.eq.s32.totalorder %s18, 1
      %p57 = scmp.ne.s32.totalorder %s52, %s54
      %p58 = scmp.eq.s32.totalorder %s18, 0
      %p59 = por %p57, %p58
      %p60 = scmp.ne.s32.totalorder %s52, %s54
      %p61 = scmp.eq.s32.totalorder %s23, 1
      %p62 = por %p60, %p61
      %p63 = scmp.ne.s32.totalorder %s54, %s55
      %p64 = scmp.eq.s32.totalorder %s23, 0
      %p65 = por %p63, %p64
      %p66 = scmp.ne.s32.totalorder %s54, %s55
      %p67 = scmp.eq.s32.totalorder %s24, 1
      %p68 = por %p66, %p67
      %p70 = scmp.ne.s32.totalorder %s55, %s69
      %p71 = scmp.eq.s32.totalorder %s24, 0
      %p72 = por %p70, %p71
      %s74 = sadd.s32 %s73, 1
      %p77 = scmp.eq.s32.totalorder %s18, 1
      %p78 = scmp.ne.s32.totalorder %s73, %s75
      %p79 = scmp.eq.s32.totalorder %s18, 0
      %p80 = por %p78, %p79
      %p81 = scmp.ne.s32.totalorder %s73, %s75
      %p82 = scmp.eq.s32.totalorder %s23, 1
      %p83 = por %p81, %p82
      %p84 = scmp.ne.s32.totalorder %s75, %s76
      %p85 = scmp.eq.s32.totalorder %s23, 0
      %p86 = por %p84, %p85
      %p87 = scmp.ne.s32.totalorder %s75, %s76
      %p88 = scmp.eq.s32.totalorder %s24, 1
      %p89 = por %p87, %p88
      %p91 = scmp.ne.s32.totalorder %s76, %s90
      %p92 = scmp.eq.s32.totalorder %s24, 0
      %p93 = por %p91, %p92
      %s95 = sadd.s32 %s94, 1
      %p98 = scmp.eq.s32.totalorder %s18, 1
      %p99 = scmp.ne.s32.totalorder %s94, %s96
      %p100 = scmp.eq.s32.totalorder %s18, 0
      %p101 = por %p99, %p100
      %p102 = scmp.ne.s32.totalorder %s94, %s96
      %p103 = scmp.eq.s32.totalorder %s23, 1
      %p104 = por %p102, %p103
      %p105 = scmp.ne.s32.totalorder %s96, %s97
      %p106 = scmp.eq.s32.totalorder %s23, 0
      %p107 = por %p105, %p106
      %p108 = scmp.ne.s32.totalorder %s96, %s97
      %p109 = scmp.eq.s32.totalorder %s24, 1
      %p110 = por %p108, %p109
      %p112 = scmp.ne.s32.totalorder %s97, %s111
      %p113 = scmp.eq.s32.totalorder %s24, 0
      %p114 = por %p112, %p113
      %s116 = sadd.s32 %s115, 1
      %p119 = scmp.eq.s32.totalorder %s18, 1
      %p120 = scmp.ne.s32.totalorder %s115, %s117
      %p121 = scmp.eq.s32.totalorder %s18, 0
      %p122 = por %p120, %p121
      %p123 = scmp.ne.s32.totalorder %s115, %s117
      %p124 = scmp.eq.s32.totalorder %s23, 1
      %p125 = por %p123, %p124
      %p126 = scmp.ne.s32.totalorder %s117, %s118
      %p127 = scmp.eq.s32.totalorder %s23, 0
      %p128 = por %p126, %p127
      %p129 = scmp.ne.s32.totalorder %s117, %s118
      %p130 = scmp.eq.s32.totalorder %s24, 1
      %p131 = por %p129, %p130
      %p133 = scmp.ne.s32.totalorder %s118, %s132
      %p134 = scmp.eq.s32.totalorder %s24, 0
      %p135 = por %p133, %p134
      %s136 = ssub.s32 %s18, %s25
      %p137 = scmp.eq.s32.totalorder %s136, 0
      %s139 = sadd.s32 %s138, 1
      %s140 = scalar_select %p137, %s138, %s139
      %p143 = pneg %p137
      %p144 = scmp.eq.s32.totalorder %s18, 1
      %p145 = por %p143, %p144
      %p146 = scmp.ne.s32.totalorder %s138, %s141
      %p147 = scmp.eq.s32.totalorder %s18, 0
      %p148 = por %p146, %p147
      %p149 = scmp.ne.s32.totalorder %s138, %s141
      %p150 = scmp.eq.s32.totalorder %s23, 1
      %p151 = por %p149, %p150
      %p152 = scmp.ne.s32.totalorder %s141, %s142
      %p153 = scmp.eq.s32.totalorder %s23, 0
      %p154 = por %p152, %p153
      %p155 = scmp.ne.s32.totalorder %s141, %s142
      %p156 = scmp.eq.s32.totalorder %s24, 1
      %p157 = por %p155, %p156
      %p159 = scmp.ne.s32.totalorder %s142, %s158
      %p160 = scmp.eq.s32.totalorder %s24, 0
      %p161 = por %p159, %p160
      %p162 = scmp.le.s32.totalorder 1, %s18
      %p163 = scmp.lt.s32.totalorder %s18, 3
      %p164 = pnand %p162, %p163
      %p165 = pneg %p164
      // Predicated region
      $region9: #{tpu_custom_call.1} parent=5 // pred_check
        _
      $region10: #{tpu_custom_call.1} parent=5 // pred_check_branch
        %167 = sbr.rel (%p164) target = $region12
      $region11: #{tpu_custom_call.1} parent=5 // pred_region
        %s168 = ssub.s32 %s18, 1
        // Predicated region
        $region13: #{tpu_custom_call.1} parent=11 // pred_check
          %p169 = pneg %p65
        $region14: #{tpu_custom_call.1} parent=11 // pred_check_branch
          %171 = sbr.rel (%p169) target = $region16
        $region15: #{tpu_custom_call.1} parent=11 // pred_region
          %s173 = ssub.s32 1024, 1024
          %174 = vsyncadd [#allocation6], %s173
          %s175 = sshll.u32 [#allocation5], 4
          %s176 = int_to_ptr.vmem [resolvable:$true] %s175
          %181 = dma.hbm_to_vmem [thread:$0]  %s1, 1024, %s176, [#allocation6], 256, 256, 16
        $region16: #{tpu_custom_call.1} parent=11 // pred_fallthru
          _
        // Predicated region
        $region17: #{tpu_custom_call.1} parent=11 // pred_check
          %p182 = pneg %p86
        $region18: #{tpu_custom_call.1} parent=11 // pred_check_branch
          %184 = sbr.rel (%p182) target = $region20
        $region19: #{tpu_custom_call.1} parent=11 // pred_region
          _
        $region20: #{tpu_custom_call.1} parent=11 // pred_fallthru
          _
        // Predicated region
        $region21: #{tpu_custom_call.1} parent=11 // pred_check
          %p185 = pneg %p107
        $region22: #{tpu_custom_call.1} parent=11 // pred_check_branch
          %187 = sbr.rel (%p185) target = $region24
        $region23: #{tpu_custom_call.1} parent=11 // pred_region
          %s189 = ssub.s32 4096, 4096
          %190 = vsyncadd [#allocation6], %s189
          %s191 = sshll.u32 [#allocation7], 4
          %s192 = int_to_ptr.vmem [resolvable:$true] %s191
          %197 = dma.hbm_to_vmem [thread:$0]  %s3, 4096, %s192, [#allocation6], 128, 128, 8
        $region24: #{tpu_custom_call.1} parent=11 // pred_fallthru
          _
        // Predicated region
        $region25: #{tpu_custom_call.1} parent=11 // pred_check
          %p198 = pneg %p128
        $region26: #{tpu_custom_call.1} parent=11 // pred_check_branch
          %200 = sbr.rel (%p198) target = $region28
        $region27: #{tpu_custom_call.1} parent=11 // pred_region
          _
        $region28: #{tpu_custom_call.1} parent=11 // pred_fallthru
          _
      $region12: #{tpu_custom_call.1} parent=5 // pred_fallthru
        _
      %p201 = scmp.lt.s32.totalorder %s18, 2
      // Predicated region
      $region29: #{tpu_custom_call.1} parent=5 // pred_check
        %p202 = pneg %p201
      $region30: #{tpu_custom_call.1} parent=5 // pred_check_branch
        %204 = sbr.rel (%p202) target = $region32
      $region31: #{tpu_custom_call.1} parent=5 // pred_region
        // Predicated region
        $region33: #{tpu_custom_call.1} parent=31 // pred_check
          %p205 = pneg %p38
        $region34: #{tpu_custom_call.1} parent=31 // pred_check_branch
          %207 = sbr.rel (%p205) target = $region36
        $region35: #{tpu_custom_call.1} parent=31 // pred_region
          %s208 = sand.u32 %s28, 1
          %s209 = scalar_lea.sflag [#allocation3], %s208
          %s210 = sand.u32 %s28, 1
          %s211 = smul.addr %s210, 8
          %s212 = scalar_lea.vmem [#allocation2], %s211
          %s214 = ssub.s32 128, 128
          %215 = vsyncadd %s209, %s214
          %s216 = smul.addr %s18, 128
          %s217 = scalar_lea.hbm %s0, %s216
          %s219 = sshll.u32 %s212, 4
          %s220 = int_to_ptr.vmem [resolvable:$true] %s219
          %222 = dma.hbm_to_vmem [thread:$0]  %s217, 128, %s220, %s209
        $region36: #{tpu_custom_call.1} parent=31 // pred_fallthru
          _
      $region32: #{tpu_custom_call.1} parent=5 // pred_fallthru
        _
      %p223 = scmp.le.s32.totalorder 1, %s18
      %p224 = scmp.lt.s32.totalorder %s18, 3
      %p225 = pnand %p223, %p224
      %p226 = pneg %p225
      // Predicated region
      $region37: #{tpu_custom_call.1} parent=5 // pred_check
        _
      $region38: #{tpu_custom_call.1} parent=5 // pred_check_branch
        %228 = sbr.rel (%p225) target = $region40
      $region39: #{tpu_custom_call.1} parent=5 // pred_region
        %s229 = ssub.s32 %s18, 1
        %s230 = sand.u32 %s31, 1
        %s231 = scalar_lea.sflag [#allocation3], %s230
        %s232 = sand.u32 %s31, 1
        %s233 = smul.addr %s232, 8
        %s234 = scalar_lea.vmem [#allocation2], %s233
        // Predicated region
        $region41: #{tpu_custom_call.1} parent=39 // pred_check
          %p235 = pneg %p44
        $region42: #{tpu_custom_call.1} parent=39 // pred_check_branch
          %237 = sbr.rel (%p235) target = $region44
        $region43: #{tpu_custom_call.1} parent=39 // pred_region
          %238 = dma.done %s231, 128
        $region44: #{tpu_custom_call.1} parent=39 // pred_fallthru
          _
        // Predicated region
        $region45: #{tpu_custom_call.1} parent=39 // pred_check
          %p239 = pneg %p65
        $region46: #{tpu_custom_call.1} parent=39 // pred_check_branch
          %241 = sbr.rel (%p239) target = $region48
        $region47: #{tpu_custom_call.1} parent=39 // pred_region
          %242 = dma.done [#allocation6], 1024
        $region48: #{tpu_custom_call.1} parent=39 // pred_fallthru
          _
        // Predicated region
        $region49: #{tpu_custom_call.1} parent=39 // pred_check
          %p243 = pneg %p107
        $region50: #{tpu_custom_call.1} parent=39 // pred_check_branch
          %245 = sbr.rel (%p243) target = $region52
        $region51: #{tpu_custom_call.1} parent=39 // pred_region
          %246 = dma.done [#allocation6], 4096
        $region52: #{tpu_custom_call.1} parent=39 // pred_fallthru
          _
        %s247 = sand.u32 %s31, 1
        %s248 = scalar_lea.sflag [#allocation3], %s247
        %s249 = sand.u32 %s31, 1
        %s250 = smul.addr %s249, 8
        %s251 = scalar_lea.vmem [#allocation2], %s250
        %p252 = pneg %p44
        %p253 = pneg %p41
        %p254 = pneg %p65
        %p255 = pneg %p62
        %p256 = pneg %p86
        %p257 = pneg %p83
        %p258 = pneg %p107
        %p259 = pneg %p104
        %p260 = pneg %p128
        %p261 = pneg %p125
        %p262 = pneg %p154
        %p263 = pneg %p151
        %s264 = sand.u32 %s141, 1
        %s265 = scalar_lea.sflag [#allocation4], %s264
        %s266 = sand.u32 %s141, 1
        %s267 = smul.addr %s266, 8
        %s268 = scalar_lea.vmem [#allocation8], %s267
        %v269 = vld [vmem:[%s234] sm:$0xff]
        %v270 = vld [vmem:[#allocation5] sm:$0xff]
        %v271 = vld [vmem:[#allocation5 + $0x8] sm:$0xff]
        %v272 = vld [vmem:[#allocation5 + $0x10] sm:$0xff]
        %v273 = vld [vmem:[#allocation5 + $0x18] sm:$0xff]
        %v274 = vld [vmem:[#allocation5 + $0x20] sm:$0xff]
        %v275 = vld [vmem:[#allocation5 + $0x28] sm:$0xff]
        %v276 = vld [vmem:[#allocation5 + $0x30] sm:$0xff]
        %v277 = vld [vmem:[#allocation5 + $0x38] sm:$0xff]
        %v278 = vld [vmem:[%s2] sm:$0x3]
        %v280 = vlaneseq
        %v281 = vshrl.u32 %v280, 7
        %v282 = vsub.s32 0, %v281
        %v283 = vrot.slane %v278, %v282
        %v284 = vlaneseq
        %v285 = vshrl.u32 %v284, 7
        %v286 = vsub.s32 1, %v285
        %v287 = vrot.slane %v278, %v286
        %vm290 = vcmask 261120
        %v292 = vsel %vm290, %v269, 0
        %294 = vmatprep.subr.mxu0 %v271
        %295 = vmatpush1.msra.mxu0 %v270
        %296 = vmatprep.subr.mxu0 %v273
        %297 = vmatpush1.msra.mxu0 %v272
        %298 = vmatprep.subr.mxu0 %v275
        %299 = vmatpush1.msra.mxu0 %v274
        %300 = vmatprep.subr.mxu0 %v277
        %301 = vmatpush1.msra.mxu0 %v276
        %302 = vmatprep.subr.mxu0 0.0
        %303 = vmatpush1.msra.mxu0 0.0
        %304 = vmatprep.subr.mxu0 0.0
        %305 = vmatpush1.msra.mxu0 0.0
        %306 = vmatprep.subr.mxu0 0.0
        %307 = vmatpush1.msra.mxu0 0.0
        %308 = vmatprep.subr.mxu0 0.0
        %309 = vmatpush1.msra.mxu0 0.0
        %310 = vmatprep.subr.mxu0 0.0
        %311 = vmatpush1.msra.mxu0 0.0
        %312 = vmatprep.subr.mxu0 0.0
        %313 = vmatpush1.msra.mxu0 0.0
        %314 = vmatprep.subr.mxu0 0.0
        %315 = vmatpush1.msra.mxu0 0.0
        %316 = vmatprep.subr.mxu0 0.0
        %317 = vmatpush1.msra.mxu0 0.0
        %318 = vmatprep.subr.mxu0 0.0
        %319 = vmatpush1.msra.mxu0 0.0
        %320 = vmatprep.subr.mxu0 0.0
        %321 = vmatpush1.msra.mxu0 0.0
        %322 = vmatprep.subr.mxu0 0.0
        %323 = vmatpush1.msra.mxu0 0.0
        %324 = vmatprep.subr.mxu0 0.0
        %325 = vmatpush1.msra.mxu0 0.0
        %326 = vmatprep.subr.mxu0 0.0
        %327 = vmatpush1.msra.mxu0 0.0
        %328 = vmatprep.subr.mxu0 0.0
        %329 = vmatpush1.msra.mxu0 0.0
        %330 = vmatprep.subr.mxu0 0.0
        %331 = vmatpush1.msra.mxu0 0.0
        %332 = vmatprep.subr.mxu0 0.0
        %333 = vmatpush1.msra.mxu0 0.0
        %334 = vmatprep.subr.mxu0 0.0
        %335 = vmatpush1.msra.mxu0 0.0
        %336 = vmatprep.subr.mxu0 0.0
        %337 = vmatpush1.msra.mxu0 0.0
        %338 = vmatprep.subr.mxu0 0.0
        %339 = vmatpush1.msra.mxu0 0.0
        %340 = vmatprep.subr.mxu0 0.0
        %341 = vmatpush1.msra.mxu0 0.0
        %342 = vmatprep.subr.mxu0 0.0
        %343 = vmatpush1.msra.mxu0 0.0
        %344 = vmatprep.subr.mxu0 0.0
        %345 = vmatpush1.msra.mxu0 0.0
        %346 = vmatprep.subr.mxu0 0.0
        %347 = vmatpush1.msra.mxu0 0.0
        %348 = vmatprep.subr.mxu0 0.0
        %349 = vmatpush1.msra.mxu0 0.0
        %350 = vmatprep.subr.mxu0 0.0
        %351 = vmatpush1.msra.mxu0 0.0
        %352 = vmatprep.subr.mxu0 0.0
        %353 = vmatpush1.msra.mxu0 0.0
        %354 = vmatprep.subr.mxu0 0.0
        %355 = vmatpush1.msra.mxu0 0.0
        %356 = vmatprep.subr.mxu0 0.0
        %357 = vmatpush1.msra.mxu0 0.0
        %358 = vmatprep.mubr.f32.mxu0 0.0
        %359 = vmatmul.mubr.f32.gmra.mrb[0].mxu0 %v292
        %v360 = vpop.f32.mrb[0].mxu0
        %v361 = vadd.f32 %v283, %v360
        %v362 = vpop.f32.mrb[0].mxu0
        %v363 = vadd.f32 %v287, %v362
        %364 = vdwg.mxu0
        %v365 = vmul.f32 %v361, 0.5
        %v366 = vmul.f32 %v363, 0.5
        %v367 = vmul.f32 %v361, 0.70710677
        %v368 = vmul.f32 %v363, 0.70710677
        %v369 = verf.f32.pop %v367
        %v370 = verf.f32.pop %v368
        %v371 = vadd.f32 %v369, 1.0
        %v372 = vadd.f32 %v370, 1.0
        %v373 = vmul.f32 %v365, %v371
        %v374 = vmul.f32 %v366, %v372
        %v375 = vld [vmem:[#allocation7] sm:$0xff]
        %v376 = vld [vmem:[#allocation7 + $0x8] sm:$0xff]
        %v377 = vld [vmem:[#allocation7 + $0x10] sm:$0xff]
        %v378 = vld [vmem:[#allocation7 + $0x18] sm:$0xff]
        %v379 = vld [vmem:[#allocation7 + $0x20] sm:$0xff]
        %v380 = vld [vmem:[#allocation7 + $0x28] sm:$0xff]
        %v381 = vld [vmem:[#allocation7 + $0x30] sm:$0xff]
        %v382 = vld [vmem:[#allocation7 + $0x38] sm:$0xff]
        %v383 = vld [vmem:[#allocation7 + $0x40] sm:$0xff]
        %v384 = vld [vmem:[#allocation7 + $0x48] sm:$0xff]
        %v385 = vld [vmem:[#allocation7 + $0x50] sm:$0xff]
        %v386 = vld [vmem:[#allocation7 + $0x58] sm:$0xff]
        %v387 = vld [vmem:[#allocation7 + $0x60] sm:$0xff]
        %v388 = vld [vmem:[#allocation7 + $0x68] sm:$0xff]
        %v389 = vld [vmem:[#allocation7 + $0x70] sm:$0xff]
        %v390 = vld [vmem:[#allocation7 + $0x78] sm:$0xff]
        %v391 = vld [vmem:[#allocation7 + $0x80] sm:$0xff]
        %v392 = vld [vmem:[#allocation7 + $0x88] sm:$0xff]
        %v393 = vld [vmem:[#allocation7 + $0x90] sm:$0xff]
        %v394 = vld [vmem:[#allocation7 + $0x98] sm:$0xff]
        %v395 = vld [vmem:[#allocation7 + $0xa0] sm:$0xff]
        %v396 = vld [vmem:[#allocation7 + $0xa8] sm:$0xff]
        %v397 = vld [vmem:[#allocation7 + $0xb0] sm:$0xff]
        %v398 = vld [vmem:[#allocation7 + $0xb8] sm:$0xff]
        %v399 = vld [vmem:[#allocation7 + $0xc0] sm:$0xff]
        %v400 = vld [vmem:[#allocation7 + $0xc8] sm:$0xff]
        %v401 = vld [vmem:[#allocation7 + $0xd0] sm:$0xff]
        %v402 = vld [vmem:[#allocation7 + $0xd8] sm:$0xff]
        %v403 = vld [vmem:[#allocation7 + $0xe0] sm:$0xff]
        %v404 = vld [vmem:[#allocation7 + $0xe8] sm:$0xff]
        %v405 = vld [vmem:[#allocation7 + $0xf0] sm:$0xff]
        %v406 = vld [vmem:[#allocation7 + $0xf8] sm:$0xff]
        %v407 = vld [vmem:[%s4] sm:$0x1]
        %v409 = vlaneseq
        %v410 = vshrl.u32 %v409, 7
        %v411 = vsub.s32 0, %v410
        %v412 = vrot.slane %v407, %v411
        %414 = vmatprep.subr.mxu0 0.0
        %415 = vmatpush1.msra.mxu0 %v375
        %416 = vmatprep.subr.mxu0 0.0
        %417 = vmatpush1.msra.mxu0 %v376
        %418 = vmatprep.subr.mxu0 0.0
        %419 = vmatpush1.msra.mxu0 %v377
        %420 = vmatprep.subr.mxu0 0.0
        %421 = vmatpush1.msra.mxu0 %v378
        %422 = vmatprep.subr.mxu0 0.0
        %423 = vmatpush1.msra.mxu0 %v379
        %424 = vmatprep.subr.mxu0 0.0
        %425 = vmatpush1.msra.mxu0 %v380
        %426 = vmatprep.subr.mxu0 0.0
        %427 = vmatpush1.msra.mxu0 %v381
        %428 = vmatprep.subr.mxu0 0.0
        %429 = vmatpush1.msra.mxu0 %v382
        %430 = vmatprep.subr.mxu0 0.0
        %431 = vmatpush1.msra.mxu0 %v383
        %432 = vmatprep.subr.mxu0 0.0
        %433 = vmatpush1.msra.mxu0 %v384
        %434 = vmatprep.subr.mxu0 0.0
        %435 = vmatpush1.msra.mxu0 %v385
        %436 = vmatprep.subr.mxu0 0.0
        %437 = vmatpush1.msra.mxu0 %v386
        %438 = vmatprep.subr.mxu0 0.0
        %439 = vmatpush1.msra.mxu0 %v387
        %440 = vmatprep.subr.mxu0 0.0
        %441 = vmatpush1.msra.mxu0 %v388
        %442 = vmatprep.subr.mxu0 0.0
        %443 = vmatpush1.msra.mxu0 %v389
        %444 = vmatprep.subr.mxu0 0.0
        %445 = vmatpush1.msra.mxu0 %v390
        %446 = vmatprep.subr.mxu0 0.0
        %447 = vmatpush1.msra.mxu0 %v391
        %448 = vmatprep.subr.mxu0 0.0
        %449 = vmatpush1.msra.mxu0 %v392
        %450 = vmatprep.subr.mxu0 0.0
        %451 = vmatpush1.msra.mxu0 %v393
        %452 = vmatprep.subr.mxu0 0.0
        %453 = vmatpush1.msra.mxu0 %v394
        %454 = vmatprep.subr.mxu0 0.0
        %455 = vmatpush1.msra.mxu0 %v395
        %456 = vmatprep.subr.mxu0 0.0
        %457 = vmatpush1.msra.mxu0 %v396
        %458 = vmatprep.subr.mxu0 0.0
        %459 = vmatpush1.msra.mxu0 %v397
        %460 = vmatprep.subr.mxu0 0.0
        %461 = vmatpush1.msra.mxu0 %v398
        %462 = vmatprep.subr.mxu0 0.0
        %463 = vmatpush1.msra.mxu0 %v399
        %464 = vmatprep.subr.mxu0 0.0
        %465 = vmatpush1.msra.mxu0 %v400
        %466 = vmatprep.subr.mxu0 0.0
        %467 = vmatpush1.msra.mxu0 %v401
        %468 = vmatprep.subr.mxu0 0.0
        %469 = vmatpush1.msra.mxu0 %v402
        %470 = vmatprep.subr.mxu0 0.0
        %471 = vmatpush1.msra.mxu0 %v403
        %472 = vmatprep.subr.mxu0 0.0
        %473 = vmatpush1.msra.mxu0 %v404
        %474 = vmatprep.subr.mxu0 0.0
        %475 = vmatpush1.msra.mxu0 %v405
        %476 = vmatprep.subr.mxu0 0.0
        %477 = vmatpush1.msra.mxu0 %v406
        %478 = vmatprep.mubr.f32.mxu0 %v374
        %479 = vmatmul.mubr.f32.gmra.mrb[0].mxu0 %v373
        %v480 = vpop.f32.mrb[0].mxu0
        %v481 = vadd.f32 %v412, %v480
        %v482 = vpop.f32.mrb[0].mxu0
        %483 = vdwg.mxu0
        %484 = vst [vmem:[%s268] sm:$0xff] %v481
        %s485 = sand.u32 %s141, 1
        %s486 = scalar_lea.sflag [#allocation4], %s485
        %s487 = sand.u32 %s141, 1
        %s488 = smul.addr %s487, 8
        %s489 = scalar_lea.vmem [#allocation8], %s488
        // Predicated region
        $region53: #{tpu_custom_call.1} parent=39 // pred_check
          %p490 = pneg %p151
        $region54: #{tpu_custom_call.1} parent=39 // pred_check_branch
          %492 = sbr.rel (%p490) target = $region56
        $region55: #{tpu_custom_call.1} parent=39 // pred_region
          %s494 = ssub.s32 128, 128
          %495 = vsyncadd %s486, %s494
          %s496 = smul.addr %s23, 128
          %s497 = scalar_lea.hbm %s5, %s496
          %s499 = sshll.u32 %s489, 4
          %s500 = int_to_ptr.vmem [resolvable:$true] %s499
          %502 = dma.vmem_to_hbm [thread:$0]  %s500, 128, %s497, %s486
        $region56: #{tpu_custom_call.1} parent=39 // pred_fallthru
          _
      $region40: #{tpu_custom_call.1} parent=5 // pred_fallthru
        _
      %p503 = scmp.le.s32.totalorder 2, %s18
      // Predicated region
      $region57: #{tpu_custom_call.1} parent=5 // pred_check
        %p504 = pneg %p503
      $region58: #{tpu_custom_call.1} parent=5 // pred_check_branch
        %506 = sbr.rel (%p504) target = $region60
      $region59: #{tpu_custom_call.1} parent=5 // pred_region
        %s507 = ssub.s32 %s18, 2
        // Predicated region
        $region61: #{tpu_custom_call.1} parent=59 // pred_check
          %p508 = pneg %p157
        $region62: #{tpu_custom_call.1} parent=59 // pred_check_branch
          %510 = sbr.rel (%p508) target = $region64
        $region63: #{tpu_custom_call.1} parent=59 // pred_region
          %s511 = sand.u32 %s142, 1
          %s512 = scalar_lea.sflag [#allocation4], %s511
          %s513 = sand.u32 %s142, 1
          %s514 = smul.addr %s513, 8
          %s515 = scalar_lea.vmem [#allocation8], %s514
          %516 = dma.done %s512, 128
        $region64: #{tpu_custom_call.1} parent=59 // pred_fallthru
          _
      $region60: #{tpu_custom_call.1} parent=5 // pred_fallthru
        _
    $region6: #{tpu_custom_call.1} parent=1 // loop_footer
      %s22 = sadd.s32 1, %s18
    $region7: #{tpu_custom_call.1} parent=1 // loop_footer_branch
      %17 = sbr.rel target = $region3
    $region8: #{tpu_custom_call.1} parent=1 // loop_exit
      _
    %517 = vsyncpa [#allocation3], 1
    %s518 = scalar_lea.sflag [#allocation3], 1
    %519 = vsyncpa %s518, 1
    %520 = vsyncpa [#allocation6], 1
    %521 = vsyncpa [#allocation4], 1
    %s522 = scalar_lea.sflag [#allocation4], 1
    %523 = vsyncpa %s522, 1

</llo_original>
